<compile_context>
chip_gen: v6e
topology: v6e:2x2x1
jax: 0.10.0
libtpu: 0.0.40
codegen_flags: <defaults>
</compile_context>

<pallas_src>
import functools
import math

import jax
import jax.numpy as jnp
from jax import lax
from jax.experimental import pallas as pl
from jax.experimental.pallas import tpu as pltpu


def _pick_tile(dim, target):
    """Largest tile <= target that divides dim and is a multiple of 8 (or dim itself)."""
    if dim <= target:
        return dim
    t = (target // 8) * 8
    while t >= 8:
        if dim % t == 0:
            return t
        t -= 8
    return dim


# ---------------------------------------------------------------------------
# Fused Q/K/V projection + head-split kernel
# ---------------------------------------------------------------------------
def _qkv_proj_kernel(xq_ref, xk_ref, xv_ref, w_ref, b_ref,
                     q_ref, k_ref, v_ref, *, num_heads, head_dim):
    xs = (xq_ref, xk_ref, xv_ref)
    outs = (q_ref, k_ref, v_ref)
    for t in range(3):
        x = xs[t][0].astype(jnp.bfloat16)                              # (ts, E)
        y = jnp.dot(x, w_ref[t], preferred_element_type=jnp.float32)   # bf16 MXU, f32 acc
        y = (y + b_ref[t]).astype(jnp.bfloat16)                        # (ts, E)
        for h in range(num_heads):                                     # head split in-kernel
            outs[t][0, h] = y[:, h * head_dim:(h + 1) * head_dim]


# ---------------------------------------------------------------------------
# Attention kernel (one (batch, q-tile, head) step per grid point)
# ---------------------------------------------------------------------------
def _softmax_k(x):
    m = jnp.max(x, axis=-1, keepdims=True)
    e = jnp.exp(x - m)
    return e * pl.reciprocal(jnp.sum(e, axis=-1, keepdims=True), approx=True)


def _attn_kernel(scal_ref, q_ref, k_ref, kq_ref, v_ref, rel_ref, ts_ref, mask_ref,
                 cgw_ref, out_ref, attn_ref, rel_attn_s, ts_exp_s):
    h = pl.program_id(2)
    msk = mask_ref[0] > 0.5                                            # (tq, S) True = masked

    # head-invariant work: computed once per (batch, q-tile), reused for all heads
    @pl.when(h == 0)
    def _():
        rel = rel_ref[0]
        rel_attn_s[...] = _softmax_k(jnp.where(rel == 0.0, -10000.0, rel))
        ts_exp_s[...] = jnp.where(msk, -jnp.inf, jnp.exp(-jnp.abs(ts_ref[0])))

    cb = scal_ref[0]   # clip bias
    gb = scal_ref[1]   # guessing bias
    l1 = scal_ref[2]
    l2 = scal_ref[3]

    q = q_ref[0, 0]     # (tq, D) bf16; 1/sqrt(D) already folded into Wq
    k = k_ref[0, 0]     # (S,  D) bf16 (full key axis)
    kq = kq_ref[0, 0]   # (tq, D) bf16 — key rows at this tile's *query* positions
    v = v_ref[0, 0]     # (S,  D) bf16

    # q @ k^T without materializing a transpose: contract the D axis of both operands
    scores = lax.dot_general(q, k, (((1,), (1,)), ((), ())),
                             preferred_element_type=jnp.float32)       # (tq, S)
    scores = jnp.where(msk, -1e9, scores)

    # clip / guessing factors: one fused Linear(D -> 2) on the key rows (query-indexed)
    cg = jnp.dot(kq.astype(jnp.float32), cgw_ref[...],
                 preferred_element_type=jnp.float32)                   # (tq, 2)
    cf = cg[:, 0:1] + cb
    gf = cg[:, 1:2] + gb
    r1 = jax.nn.sigmoid(gf - cf) + gf                                  # (tq, 1)

    rs = ts_exp_s[...] + r1                                            # (tq, S)

    prob = _softmax_k(scores)
    tattn = _softmax_k(rs)
    prob = (1.0 - l2) * prob + l2 * tattn
    prob = (1.0 - l1) * prob + l1 * rel_attn_s[...]

    out_ref[0, 0] = jnp.dot(prob.astype(jnp.bfloat16), v,
                            preferred_element_type=jnp.float32)
    attn_ref[0, 0] = prob


# ---------------------------------------------------------------------------
# Wrapper: full MultiHeadedAttention forward (encode_pos=False)
# ---------------------------------------------------------------------------
def multi_head_attention(params, query, key, value, rel, l1, l2, timestamp, mask):
    B, S, E = query.shape
    H = params["num_heads"]
    D = E // H
    inv_sqrt_d = 1.0 / math.sqrt(D)

    # ---- fused Q/K/V projection (head split in-kernel, outputs (B,H,S,D) bf16) ----
    w_stk = jnp.stack([params["wq"] * inv_sqrt_d, params["wk"], params["wv"]])  # (3,E,E)
    w_stk = w_stk.astype(jnp.bfloat16)
    b_stk = jnp.stack([params["bq"] * inv_sqrt_d, params["bk"], params["bv"]])  # (3,1,E) f32

    ts_tile = _pick_tile(S, 256)
    q, k, v = pl.pallas_call(
        functools.partial(_qkv_proj_kernel, num_heads=H, head_dim=D),
        grid=(B, S // ts_tile),
        in_specs=[
            pl.BlockSpec((1, ts_tile, E), lambda b, s: (b, s, 0)),     # query rows
            pl.BlockSpec((1, ts_tile, E), lambda b, s: (b, s, 0)),     # key rows
            pl.BlockSpec((1, ts_tile, E), lambda b, s: (b, s, 0)),     # value rows
            pl.BlockSpec((3, E, E), lambda b, s: (0, 0, 0)),           # weights (resident)
            pl.BlockSpec((3, 1, E), lambda b, s: (0, 0, 0)),           # biases  (resident)
        ],
        out_specs=[
            pl.BlockSpec((1, H, ts_tile, D), lambda b, s: (b, 0, s, 0)),
            pl.BlockSpec((1, H, ts_tile, D), lambda b, s: (b, 0, s, 0)),
            pl.BlockSpec((1, H, ts_tile, D), lambda b, s: (b, 0, s, 0)),
        ],
        out_shape=[
            jax.ShapeDtypeStruct((B, H, S, D), jnp.bfloat16),
            jax.ShapeDtypeStruct((B, H, S, D), jnp.bfloat16),
            jax.ShapeDtypeStruct((B, H, S, D), jnp.bfloat16),
        ],
        compiler_params=pltpu.CompilerParams(
            dimension_semantics=("parallel", "parallel"),
            vmem_limit_bytes=48 * 1024 * 1024),
    )(query, key, value, w_stk, b_stk)

    # ---- attention ----
    scal = jnp.array([params["clip_b"], params["guess_b"], l1, l2], jnp.float32)
    cg_w = jnp.concatenate([params["clip_w"], params["guess_w"]], axis=1)   # (D, 2)
    mask_f = mask.astype(jnp.float32)

    tq = _pick_tile(S, 256)
    out, attn = pl.pallas_call(
        _attn_kernel,
        grid=(B, S // tq, H),
        in_specs=[
            pl.BlockSpec(memory_space=pltpu.MemorySpace.SMEM),               # scalars
            pl.BlockSpec((1, 1, tq, D), lambda b, qt, h: (b, h, qt, 0)),     # q tile
            pl.BlockSpec((1, 1, S, D), lambda b, qt, h: (b, h, 0, 0)),       # k (full keys)
            pl.BlockSpec((1, 1, tq, D), lambda b, qt, h: (b, h, qt, 0)),     # k @ query rows
            pl.BlockSpec((1, 1, S, D), lambda b, qt, h: (b, h, 0, 0)),       # v (full keys)
            pl.BlockSpec((1, tq, S), lambda b, qt, h: (b, qt, 0)),           # rel
            pl.BlockSpec((1, tq, S), lambda b, qt, h: (b, qt, 0)),           # timestamp
            pl.BlockSpec((1, tq, S), lambda b, qt, h: (b, qt, 0)),           # mask
            pl.BlockSpec((D, 2), lambda b, qt, h: (0, 0)),                   # [clip_w|guess_w]
        ],
        out_specs=[
            pl.BlockSpec((1, 1, tq, D), lambda b, qt, h: (b, h, qt, 0)),
            pl.BlockSpec((1, 1, tq, S), lambda b, qt, h: (b, h, qt, 0)),
        ],
        out_shape=[
            jax.ShapeDtypeStruct((B, H, S, D), jnp.float32),
            jax.ShapeDtypeStruct((B, H, S, S), jnp.float32),
        ],
        scratch_shapes=[pltpu.VMEM((tq, S), jnp.float32),      # rel_attn (head-invariant)
                        pltpu.VMEM((tq, S), jnp.float32)],     # masked exp(-|ts|)
        compiler_params=pltpu.CompilerParams(
            dimension_semantics=("parallel", "parallel", "arbitrary"),
            vmem_limit_bytes=48 * 1024 * 1024),
    )(scal, q, k, k, v, rel, timestamp, mask_f, cg_w)

    # TODO(synk): fuse this merge into the out_spec once D % 128 == 0 (lane-dense stores).
    out = out.transpose(0, 2, 1, 3).reshape(B, S, E)
    return out, attn


# ---------------------------------------------------------------------------
# Pure-f32 JAX reference (mirrors the PyTorch math exactly)
# ---------------------------------------------------------------------------
def _softmax_ref(x):
    m = jnp.max(x, axis=-1, keepdims=True)
    e = jnp.exp(x - m)
    return e / jnp.sum(e, axis=-1, keepdims=True)


def reference(params, query, key, value, rel, l1, l2, timestamp, mask):
    B, S, E = query.shape
    H = params["num_heads"]
    D = E // H

    def proj(x, w, b):
        y = x.reshape(B * S, E) @ w + b
        return y.reshape(B, S, H, D).transpose(0, 2, 1, 3)

    q = proj(query, params["wq"], params["bq"])
    k = proj(key, params["wk"], params["bk"])
    v = proj(value, params["wv"], params["bv"])

    rel_h = jnp.broadcast_to(rel[:, None], (B, H, S, S))
    ts_h = jnp.broadcast_to(timestamp[:, None], (B, H, S, S))
    msk_h = jnp.broadcast_to(mask[:, None], (B, H, S, S))

    rel_attn = _softmax_ref(jnp.where(rel_h == 0.0, -10000.0, rel_h))
    scores = jnp.einsum("bhqd,bhkd->bhqk", q, k) / math.sqrt(D)
    cf = k @ params["clip_w"] + params["clip_b"]
    gf = k @ params["guess_w"] + params["guess_b"]
    r1 = jax.nn.sigmoid(gf - cf) + gf
    scores = jnp.where(msk_h, -1e9, scores)
    time_stamp = jnp.exp(-jnp.abs(ts_h))
    time_stamp = jnp.where(msk_h, -jnp.inf, time_stamp)
    rs = time_stamp + r1
    prob = _softmax_ref(scores)
    tattn = _softmax_ref(rs)
    prob = (1.0 - l2) * prob + l2 * tattn
    prob = (1.0 - l1) * prob + l1 * rel_attn
    out = jnp.einsum("bhqk,bhkd->bhqd", prob, v)
    out = out.transpose(0, 2, 1, 3).reshape(B, S, E)
    return out, prob


# ---------------------------------------------------------------------------
if __name__ == "__main__":
    B, S, E, H = 2, 8, 32, 4
    D = E // H
    l1, l2 = 0.3, 0.2

    key0 = jax.random.PRNGKey(0)
    ks = jax.random.split(key0, 12)

    params = {
        "num_heads": H,
        # nn.Linear(E, E) x3: weights stored as (in, out) so y = x @ W + b
        "wq": jax.random.normal(ks[0], (E, E), jnp.float32) * 0.1,
        "bq": jax.random.normal(ks[1], (1, E), jnp.float32) * 0.1,
        "wk": jax.random.normal(ks[2], (E, E), jnp.float32) * 0.1,
        "bk": jax.random.normal(ks[3], (1, E), jnp.float32) * 0.1,
        "wv": jax.random.normal(ks[4], (E, E), jnp.float32) * 0.1,
        "bv": jax.random.normal(ks[5], (1, E), jnp.float32) * 0.1,
        # clip_factor / guessing_factor modeled as nn.Linear(head_size, 1)
        "clip_w": jax.random.normal(ks[6], (D, 1), jnp.float32) * 0.1,
        "clip_b": 0.05,
        "guess_w": jax.random.normal(ks[7], (D, 1), jnp.float32) * 0.1,
        "guess_b": -0.05,
    }

    query = jax.random.normal(ks[8], (B, S, E), jnp.float32)
    key_in = jax.random.normal(ks[9], (B, S, E), jnp.float32)
    value = jax.random.normal(ks[10], (B, S, E), jnp.float32)

    # rel has exact zeros (masked_fill(rel == 0, -10000) in the reference code)
    rel_raw = jax.random.normal(ks[11], (B, S, S), jnp.float32)
    rel = jnp.where(jax.random.uniform(jax.random.fold_in(key0, 1), (B, S, S)) < 0.3,
                    0.0, rel_raw)
    timestamp = jax.random.normal(jax.random.fold_in(key0, 2), (B, S, S), jnp.float32) * 3.0
    # causal mask: True = masked (future positions)
    mask = jnp.broadcast_to(jnp.triu(jnp.ones((S, S), bool), k=1), (B, S, S))

    out, attn = multi_head_attention(params, query, key_in, value, rel, l1, l2,
                                     timestamp, mask)
    out = jax.block_until_ready(out)
    attn = jax.block_until_ready(attn)

    ref_out, ref_attn = reference(params, query, key_in, value, rel, l1, l2,
                                  timestamp, mask)

    # Tolerance covers the intentional bf16 MXU inputs and approx-reciprocal softmax
    # (per perf review); the math otherwise matches the module's f32 semantics.
    assert out.shape == (B, S, E) and attn.shape == (B, H, S, S)
    assert jnp.allclose(out, ref_out, rtol=2e-2, atol=2e-2), "output mismatch"
    assert jnp.allclose(attn, ref_attn, rtol=2e-2, atol=2e-2), "attn mismatch"

    print("KERNEL_OK")
</pallas_src>

<mosaic_0001>
module attributes {stable_mosaic.version = 11 : i64} {
  func.func @_qkv_proj_kernel(%arg0: i32, %arg1: i32, %arg2: memref<1x8x32xf32, #tpu.memory_space<vmem>>, %arg3: memref<1x8x32xf32, #tpu.memory_space<vmem>>, %arg4: memref<1x8x32xf32, #tpu.memory_space<vmem>>, %arg5: memref<3x32x32xbf16, #tpu.memory_space<vmem>>, %arg6: memref<3x1x32xf32, #tpu.memory_space<vmem>>, %arg7: memref<1x4x8x8xbf16, #tpu.memory_space<vmem>>, %arg8: memref<1x4x8x8xbf16, #tpu.memory_space<vmem>>, %arg9: memref<1x4x8x8xbf16, #tpu.memory_space<vmem>>) attributes {dimension_semantics = [#tpu.dimension_semantics<parallel>, #tpu.dimension_semantics<parallel>], iteration_bounds = array<i64: 2, 1>, scalar_prefetch = 0 : i64, scratch_operands = 0 : i64, tpu.core_type = #tpu.core_type<tc>, window_params = [{transform_indices = @transform_0, window_bounds = array<i64: 1, 8, 32>}, {transform_indices = @transform_1, window_bounds = array<i64: 1, 8, 32>}, {transform_indices = @transform_2, window_bounds = array<i64: 1, 8, 32>}, {pipeline_mode = #tpu.pipeline_mode<synchronous>, transform_indices = @transform_3, window_bounds = array<i64: 3, 32, 32>}, {pipeline_mode = #tpu.pipeline_mode<synchronous>, transform_indices = @transform_4, window_bounds = array<i64: 3, 1, 32>}, {transform_indices = @transform_5, window_bounds = array<i64: 1, 4, 8, 8>}, {transform_indices = @transform_6, window_bounds = array<i64: 1, 4, 8, 8>}, {transform_indices = @transform_7, window_bounds = array<i64: 1, 4, 8, 8>}]} {
    %c0 = arith.constant 0 : index
    %c0_0 = arith.constant 0 : index
    %c0_1 = arith.constant 0 : index
    %0 = vector.load %arg2[%c0, %c0_0, %c0_1] : memref<1x8x32xf32, #tpu.memory_space<vmem>>, vector<1x8x32xf32>
    %1 = vector.shape_cast %0 : vector<1x8x32xf32> to vector<8x32xf32>
    %2 = arith.truncf %1 : vector<8x32xf32> to vector<8x32xbf16>
    %c0_2 = arith.constant 0 : index
    %c0_3 = arith.constant 0 : index
    %c0_4 = arith.constant 0 : index
    %3 = vector.load %arg5[%c0_2, %c0_3, %c0_4] : memref<3x32x32xbf16, #tpu.memory_space<vmem>>, vector<1x32x32xbf16>
    %4 = vector.shape_cast %3 : vector<1x32x32xbf16> to vector<32x32xbf16>
    %cst = arith.constant dense<0.000000e+00> : vector<8x32xf32>
    %5 = tpu.matmul %2, %4, %cst {dimension_numbers = #tpu.dot_dimension_numbers<[1], [0], [0], [1], [0, 0, 1, 1], [], []>} : vector<8x32xbf16>, vector<32x32xbf16>, vector<8x32xf32> -> vector<8x32xf32>
    %c0_5 = arith.constant 0 : index
    %c0_6 = arith.constant 0 : index
    %c0_7 = arith.constant 0 : index
    %6 = vector.load %arg6[%c0_5, %c0_6, %c0_7] : memref<3x1x32xf32, #tpu.memory_space<vmem>>, vector<1x1x32xf32>
    %7 = vector.shape_cast %6 : vector<1x1x32xf32> to vector<1x32xf32>
    %8 = vector.broadcast %7 : vector<1x32xf32> to vector<8x32xf32>
    %9 = arith.addf %5, %8 : vector<8x32xf32>
    %10 = arith.truncf %9 : vector<8x32xf32> to vector<8x32xbf16>
    %11 = vector.extract_strided_slice %10 {offsets = [0, 0], sizes = [8, 8], strides = [1, 1]} : vector<8x32xbf16> to vector<8x8xbf16>
    %c0_8 = arith.constant 0 : index
    %c0_9 = arith.constant 0 : index
    %c0_10 = arith.constant 0 : index
    %c0_11 = arith.constant 0 : index
    %12 = vector.load %arg7[%c0_8, %c0_9, %c0_10, %c0_11] : memref<1x4x8x8xbf16, #tpu.memory_space<vmem>>, vector<1x1x8x8xbf16>
    %13 = vector.shape_cast %12 : vector<1x1x8x8xbf16> to vector<8x8xbf16>
    %14 = vector.shape_cast %11 : vector<8x8xbf16> to vector<1x1x8x8xbf16>
    tpu.vector_store %arg7[%c0_8, %c0_9, %c0_10, %c0_11], %14 {strides = array<i32>} : memref<1x4x8x8xbf16, #tpu.memory_space<vmem>>, vector<1x1x8x8xbf16>,
    %15 = vector.extract_strided_slice %10 {offsets = [0, 8], sizes = [8, 8], strides = [1, 1]} : vector<8x32xbf16> to vector<8x8xbf16>
    %c0_12 = arith.constant 0 : index
    %c1 = arith.constant 1 : index
    %c0_13 = arith.constant 0 : index
    %c0_14 = arith.constant 0 : index
    %16 = vector.load %arg7[%c0_12, %c1, %c0_13, %c0_14] : memref<1x4x8x8xbf16, #tpu.memory_space<vmem>>, vector<1x1x8x8xbf16>
    %17 = vector.shape_cast %16 : vector<1x1x8x8xbf16> to vector<8x8xbf16>
    %18 = vector.shape_cast %15 : vector<8x8xbf16> to vector<1x1x8x8xbf16>
    tpu.vector_store %arg7[%c0_12, %c1, %c0_13, %c0_14], %18 {strides = array<i32>} : memref<1x4x8x8xbf16, #tpu.memory_space<vmem>>, vector<1x1x8x8xbf16>,
    %19 = vector.extract_strided_slice %10 {offsets = [0, 16], sizes = [8, 8], strides = [1, 1]} : vector<8x32xbf16> to vector<8x8xbf16>
    %c0_15 = arith.constant 0 : index
    %c2 = arith.constant 2 : index
    %c0_16 = arith.constant 0 : index
    %c0_17 = arith.constant 0 : index
    %20 = vector.load %arg7[%c0_15, %c2, %c0_16, %c0_17] : memref<1x4x8x8xbf16, #tpu.memory_space<vmem>>, vector<1x1x8x8xbf16>
    %21 = vector.shape_cast %20 : vector<1x1x8x8xbf16> to vector<8x8xbf16>
    %22 = vector.shape_cast %19 : vector<8x8xbf16> to vector<1x1x8x8xbf16>
    tpu.vector_store %arg7[%c0_15, %c2, %c0_16, %c0_17], %22 {strides = array<i32>} : memref<1x4x8x8xbf16, #tpu.memory_space<vmem>>, vector<1x1x8x8xbf16>,
    %23 = vector.extract_strided_slice %10 {offsets = [0, 24], sizes = [8, 8], strides = [1, 1]} : vector<8x32xbf16> to vector<8x8xbf16>
    %c0_18 = arith.constant 0 : index
    %c3 = arith.constant 3 : index
    %c0_19 = arith.constant 0 : index
    %c0_20 = arith.constant 0 : index
    %24 = vector.load %arg7[%c0_18, %c3, %c0_19, %c0_20] : memref<1x4x8x8xbf16, #tpu.memory_space<vmem>>, vector<1x1x8x8xbf16>
    %25 = vector.shape_cast %24 : vector<1x1x8x8xbf16> to vector<8x8xbf16>
    %26 = vector.shape_cast %23 : vector<8x8xbf16> to vector<1x1x8x8xbf16>
    tpu.vector_store %arg7[%c0_18, %c3, %c0_19, %c0_20], %26 {strides = array<i32>} : memref<1x4x8x8xbf16, #tpu.memory_space<vmem>>, vector<1x1x8x8xbf16>,
    %c0_21 = arith.constant 0 : index
    %c0_22 = arith.constant 0 : index
    %c0_23 = arith.constant 0 : index
    %27 = vector.load %arg3[%c0_21, %c0_22, %c0_23] : memref<1x8x32xf32, #tpu.memory_space<vmem>>, vector<1x8x32xf32>
    %28 = vector.shape_cast %27 : vector<1x8x32xf32> to vector<8x32xf32>
    %29 = arith.truncf %28 : vector<8x32xf32> to vector<8x32xbf16>
    %c1_24 = arith.constant 1 : index
    %c0_25 = arith.constant 0 : index
    %c0_26 = arith.constant 0 : index
    %30 = vector.load %arg5[%c1_24, %c0_25, %c0_26] : memref<3x32x32xbf16, #tpu.memory_space<vmem>>, vector<1x32x32xbf16>
    %31 = vector.shape_cast %30 : vector<1x32x32xbf16> to vector<32x32xbf16>
    %cst_27 = arith.constant dense<0.000000e+00> : vector<8x32xf32>
    %32 = tpu.matmul %29, %31, %cst_27 {dimension_numbers = #tpu.dot_dimension_numbers<[1], [0], [0], [1], [0, 0, 1, 1], [], []>} : vector<8x32xbf16>, vector<32x32xbf16>, vector<8x32xf32> -> vector<8x32xf32>
    %c1_28 = arith.constant 1 : index
    %c0_29 = arith.constant 0 : index
    %c0_30 = arith.constant 0 : index
    %33 = vector.load %arg6[%c1_28, %c0_29, %c0_30] : memref<3x1x32xf32, #tpu.memory_space<vmem>>, vector<1x1x32xf32>
    %34 = vector.shape_cast %33 : vector<1x1x32xf32> to vector<1x32xf32>
    %35 = vector.broadcast %34 : vector<1x32xf32> to vector<8x32xf32>
    %36 = arith.addf %32, %35 : vector<8x32xf32>
    %37 = arith.truncf %36 : vector<8x32xf32> to vector<8x32xbf16>
    %38 = vector.extract_strided_slice %37 {offsets = [0, 0], sizes = [8, 8], strides = [1, 1]} : vector<8x32xbf16> to vector<8x8xbf16>
    %c0_31 = arith.constant 0 : index
    %c0_32 = arith.constant 0 : index
    %c0_33 = arith.constant 0 : index
    %c0_34 = arith.constant 0 : index
    %39 = vector.load %arg8[%c0_31, %c0_32, %c0_33, %c0_34] : memref<1x4x8x8xbf16, #tpu.memory_space<vmem>>, vector<1x1x8x8xbf16>
    %40 = vector.shape_cast %39 : vector<1x1x8x8xbf16> to vector<8x8xbf16>
    %41 = vector.shape_cast %38 : vector<8x8xbf16> to vector<1x1x8x8xbf16>
    tpu.vector_store %arg8[%c0_31, %c0_32, %c0_33, %c0_34], %41 {strides = array<i32>} : memref<1x4x8x8xbf16, #tpu.memory_space<vmem>>, vector<1x1x8x8xbf16>,
    %42 = vector.extract_strided_slice %37 {offsets = [0, 8], sizes = [8, 8], strides = [1, 1]} : vector<8x32xbf16> to vector<8x8xbf16>
    %c0_35 = arith.constant 0 : index
    %c1_36 = arith.constant 1 : index
    %c0_37 = arith.constant 0 : index
    %c0_38 = arith.constant 0 : index
    %43 = vector.load %arg8[%c0_35, %c1_36, %c0_37, %c0_38] : memref<1x4x8x8xbf16, #tpu.memory_space<vmem>>, vector<1x1x8x8xbf16>
    %44 = vector.shape_cast %43 : vector<1x1x8x8xbf16> to vector<8x8xbf16>
    %45 = vector.shape_cast %42 : vector<8x8xbf16> to vector<1x1x8x8xbf16>
    tpu.vector_store %arg8[%c0_35, %c1_36, %c0_37, %c0_38], %45 {strides = array<i32>} : memref<1x4x8x8xbf16, #tpu.memory_space<vmem>>, vector<1x1x8x8xbf16>,
    %46 = vector.extract_strided_slice %37 {offsets = [0, 16], sizes = [8, 8], strides = [1, 1]} : vector<8x32xbf16> to vector<8x8xbf16>
    %c0_39 = arith.constant 0 : index
    %c2_40 = arith.constant 2 : index
    %c0_41 = arith.constant 0 : index
    %c0_42 = arith.constant 0 : index
    %47 = vector.load %arg8[%c0_39, %c2_40, %c0_41, %c0_42] : memref<1x4x8x8xbf16, #tpu.memory_space<vmem>>, vector<1x1x8x8xbf16>
    %48 = vector.shape_cast %47 : vector<1x1x8x8xbf16> to vector<8x8xbf16>
    %49 = vector.shape_cast %46 : vector<8x8xbf16> to vector<1x1x8x8xbf16>
    tpu.vector_store %arg8[%c0_39, %c2_40, %c0_41, %c0_42], %49 {strides = array<i32>} : memref<1x4x8x8xbf16, #tpu.memory_space<vmem>>, vector<1x1x8x8xbf16>,
    %50 = vector.extract_strided_slice %37 {offsets = [0, 24], sizes = [8, 8], strides = [1, 1]} : vector<8x32xbf16> to vector<8x8xbf16>
    %c0_43 = arith.constant 0 : index
    %c3_44 = arith.constant 3 : index
    %c0_45 = arith.constant 0 : index
    %c0_46 = arith.constant 0 : index
    %51 = vector.load %arg8[%c0_43, %c3_44, %c0_45, %c0_46] : memref<1x4x8x8xbf16, #tpu.memory_space<vmem>>, vector<1x1x8x8xbf16>
    %52 = vector.shape_cast %51 : vector<1x1x8x8xbf16> to vector<8x8xbf16>
    %53 = vector.shape_cast %50 : vector<8x8xbf16> to vector<1x1x8x8xbf16>
    tpu.vector_store %arg8[%c0_43, %c3_44, %c0_45, %c0_46], %53 {strides = array<i32>} : memref<1x4x8x8xbf16, #tpu.memory_space<vmem>>, vector<1x1x8x8xbf16>,
    %c0_47 = arith.constant 0 : index
    %c0_48 = arith.constant 0 : index
    %c0_49 = arith.constant 0 : index
    %54 = vector.load %arg4[%c0_47, %c0_48, %c0_49] : memref<1x8x32xf32, #tpu.memory_space<vmem>>, vector<1x8x32xf32>
    %55 = vector.shape_cast %54 : vector<1x8x32xf32> to vector<8x32xf32>
    %56 = arith.truncf %55 : vector<8x32xf32> to vector<8x32xbf16>
    %c2_50 = arith.constant 2 : index
    %c0_51 = arith.constant 0 : index
    %c0_52 = arith.constant 0 : index
    %57 = vector.load %arg5[%c2_50, %c0_51, %c0_52] : memref<3x32x32xbf16, #tpu.memory_space<vmem>>, vector<1x32x32xbf16>
    %58 = vector.shape_cast %57 : vector<1x32x32xbf16> to vector<32x32xbf16>
    %cst_53 = arith.constant dense<0.000000e+00> : vector<8x32xf32>
    %59 = tpu.matmul %56, %58, %cst_53 {dimension_numbers = #tpu.dot_dimension_numbers<[1], [0], [0], [1], [0, 0, 1, 1], [], []>} : vector<8x32xbf16>, vector<32x32xbf16>, vector<8x32xf32> -> vector<8x32xf32>
    %c2_54 = arith.constant 2 : index
    %c0_55 = arith.constant 0 : index
    %c0_56 = arith.constant 0 : index
    %60 = vector.load %arg6[%c2_54, %c0_55, %c0_56] : memref<3x1x32xf32, #tpu.memory_space<vmem>>, vector<1x1x32xf32>
    %61 = vector.shape_cast %60 : vector<1x1x32xf32> to vector<1x32xf32>
    %62 = vector.broadcast %61 : vector<1x32xf32> to vector<8x32xf32>
    %63 = arith.addf %59, %62 : vector<8x32xf32>
    %64 = arith.truncf %63 : vector<8x32xf32> to vector<8x32xbf16>
    %65 = vector.extract_strided_slice %64 {offsets = [0, 0], sizes = [8, 8], strides = [1, 1]} : vector<8x32xbf16> to vector<8x8xbf16>
    %c0_57 = arith.constant 0 : index
    %c0_58 = arith.constant 0 : index
    %c0_59 = arith.constant 0 : index
    %c0_60 = arith.constant 0 : index
    %66 = vector.load %arg9[%c0_57, %c0_58, %c0_59, %c0_60] : memref<1x4x8x8xbf16, #tpu.memory_space<vmem>>, vector<1x1x8x8xbf16>
    %67 = vector.shape_cast %66 : vector<1x1x8x8xbf16> to vector<8x8xbf16>
    %68 = vector.shape_cast %65 : vector<8x8xbf16> to vector<1x1x8x8xbf16>
    tpu.vector_store %arg9[%c0_57, %c0_58, %c0_59, %c0_60], %68 {strides = array<i32>} : memref<1x4x8x8xbf16, #tpu.memory_space<vmem>>, vector<1x1x8x8xbf16>,
    %69 = vector.extract_strided_slice %64 {offsets = [0, 8], sizes = [8, 8], strides = [1, 1]} : vector<8x32xbf16> to vector<8x8xbf16>
    %c0_61 = arith.constant 0 : index
    %c1_62 = arith.constant 1 : index
    %c0_63 = arith.constant 0 : index
    %c0_64 = arith.constant 0 : index
    %70 = vector.load %arg9[%c0_61, %c1_62, %c0_63, %c0_64] : memref<1x4x8x8xbf16, #tpu.memory_space<vmem>>, vector<1x1x8x8xbf16>
    %71 = vector.shape_cast %70 : vector<1x1x8x8xbf16> to vector<8x8xbf16>
    %72 = vector.shape_cast %69 : vector<8x8xbf16> to vector<1x1x8x8xbf16>
    tpu.vector_store %arg9[%c0_61, %c1_62, %c0_63, %c0_64], %72 {strides = array<i32>} : memref<1x4x8x8xbf16, #tpu.memory_space<vmem>>, vector<1x1x8x8xbf16>,
    %73 = vector.extract_strided_slice %64 {offsets = [0, 16], sizes = [8, 8], strides = [1, 1]} : vector<8x32xbf16> to vector<8x8xbf16>
    %c0_65 = arith.constant 0 : index
    %c2_66 = arith.constant 2 : index
    %c0_67 = arith.constant 0 : index
    %c0_68 = arith.constant 0 : index
    %74 = vector.load %arg9[%c0_65, %c2_66, %c0_67, %c0_68] : memref<1x4x8x8xbf16, #tpu.memory_space<vmem>>, vector<1x1x8x8xbf16>
    %75 = vector.shape_cast %74 : vector<1x1x8x8xbf16> to vector<8x8xbf16>
    %76 = vector.shape_cast %73 : vector<8x8xbf16> to vector<1x1x8x8xbf16>
    tpu.vector_store %arg9[%c0_65, %c2_66, %c0_67, %c0_68], %76 {strides = array<i32>} : memref<1x4x8x8xbf16, #tpu.memory_space<vmem>>, vector<1x1x8x8xbf16>,
    %77 = vector.extract_strided_slice %64 {offsets = [0, 24], sizes = [8, 8], strides = [1, 1]} : vector<8x32xbf16> to vector<8x8xbf16>
    %c0_69 = arith.constant 0 : index
    %c3_70 = arith.constant 3 : index
    %c0_71 = arith.constant 0 : index
    %c0_72 = arith.constant 0 : index
    %78 = vector.load %arg9[%c0_69, %c3_70, %c0_71, %c0_72] : memref<1x4x8x8xbf16, #tpu.memory_space<vmem>>, vector<1x1x8x8xbf16>
    %79 = vector.shape_cast %78 : vector<1x1x8x8xbf16> to vector<8x8xbf16>
    %80 = vector.shape_cast %77 : vector<8x8xbf16> to vector<1x1x8x8xbf16>
    tpu.vector_store %arg9[%c0_69, %c3_70, %c0_71, %c0_72], %80 {strides = array<i32>} : memref<1x4x8x8xbf16, #tpu.memory_space<vmem>>, vector<1x1x8x8xbf16>,
    return
  }
  func.func @transform_0(%arg0: i32, %arg1: i32) -> (i32, i32, i32) {
    %c0_i32 = arith.constant 0 : i32
    %c0_i32_0 = arith.constant 0 : i32
    return %arg0, %arg1, %c0_i32 : i32, i32, i32
  }
  func.func @transform_1(%arg0: i32, %arg1: i32) -> (i32, i32, i32) {
    %c0_i32 = arith.constant 0 : i32
    %c0_i32_0 = arith.constant 0 : i32
    return %arg0, %arg1, %c0_i32 : i32, i32, i32
  }
  func.func @transform_2(%arg0: i32, %arg1: i32) -> (i32, i32, i32) {
    %c0_i32 = arith.constant 0 : i32
    %c0_i32_0 = arith.constant 0 : i32
    return %arg0, %arg1, %c0_i32 : i32, i32, i32
  }
  func.func @transform_3(%arg0: i32, %arg1: i32) -> (i32, i32, i32) {
    %c0_i32 = arith.constant 0 : i32
    %c0_i32_0 = arith.constant 0 : i32
    %c0_i32_1 = arith.constant 0 : i32
    %c0_i32_2 = arith.constant 0 : i32
    return %c0_i32, %c0_i32_0, %c0_i32_1 : i32, i32, i32
  }
  func.func @transform_4(%arg0: i32, %arg1: i32) -> (i32, i32, i32) {
    %c0_i32 = arith.constant 0 : i32
    %c0_i32_0 = arith.constant 0 : i32
    %c0_i32_1 = arith.constant 0 : i32
    %c0_i32_2 = arith.constant 0 : i32
    return %c0_i32, %c0_i32_0, %c0_i32_1 : i32, i32, i32
  }
  func.func @transform_5(%arg0: i32, %arg1: i32) -> (i32, i32, i32, i32) {
    %c0_i32 = arith.constant 0 : i32
    %c0_i32_0 = arith.constant 0 : i32
    %c0_i32_1 = arith.constant 0 : i32
    return %arg0, %c0_i32, %arg1, %c0_i32_0 : i32, i32, i32, i32
  }
  func.func @transform_6(%arg0: i32, %arg1: i32) -> (i32, i32, i32, i32) {
    %c0_i32 = arith.constant 0 : i32
    %c0_i32_0 = arith.constant 0 : i32
    %c0_i32_1 = arith.constant 0 : i32
    return %arg0, %c0_i32, %arg1, %c0_i32_0 : i32, i32, i32, i32
  }
  func.func @transform_7(%arg0: i32, %arg1: i32) -> (i32, i32, i32, i32) {
    %c0_i32 = arith.constant 0 : i32
    %c0_i32_0 = arith.constant 0 : i32
    %c0_i32_1 = arith.constant 0 : i32
    return %arg0, %c0_i32, %arg1, %c0_i32_0 : i32, i32, i32, i32
  }
}

</mosaic_0001>

<llo_original>
// kernel: tpu_custom_call.1
$region0: #{tpu_custom_call.1}
  #allocation0 [shape = 'u32[]', space=smem, size = 0x4, offset = 0x4, fixed_abs, tag = 'smem constant byte address 0x4 - core index']
  #allocation1 [shape = 'u32[144,128]{1,0:T(1,128)}', space=vmem, size = 0x12000, scoped, tag = 'internal scratch']
  %s0 = inlined_call_operand.hbm [shape: f32[2,8,32], index: 0, kind: input, shape index: {}]
  %s1 = inlined_call_operand.hbm [shape: f32[2,8,32], index: 1, kind: input, shape index: {}]
  %s2 = inlined_call_operand.hbm [shape: f32[2,8,32], index: 2, kind: input, shape index: {}]
  %s3 = inlined_call_operand.hbm [shape: bf16[3,32,32], index: 3, kind: input, shape index: {}]
  %s4 = inlined_call_operand.vmem [shape: f32[3,1,32], index: 4, kind: input, shape index: {}]
  %s5 = inlined_call_operand.hbm [shape: bf16[2,4,8,8], index: 5, kind: output, shape index: {0}]
  %s6 = inlined_call_operand.hbm [shape: bf16[2,4,8,8], index: 6, kind: output, shape index: {1}]
  %s7 = inlined_call_operand.hbm [shape: bf16[2,4,8,8], index: 7, kind: output, shape index: {2}]
  %8 = xla_tuple %s5, %s6, %s7
  %s9 = sld [smem:[#allocation0]]
  $region85: #{tpu_custom_call.1} parent=0
    _
  %s11 = ssub.s32 1, %s9
  %s12 = scalar_select 0, %s11, %s9
  $region1: #{tpu_custom_call.1} parent=0
    #allocation2 [shape = 'u8[8192]{0}', space=vmem, size = 0x2000, scoped, tag = 'input window, operand 0']
    #allocation3 [shape = 's32[2]{0}', space=sflag, size = 0x8, scoped, tag = 'scoped memory for tpu_custom_call.1']
    #allocation4 [shape = 's32[2]{0}', space=sflag, size = 0x8, scoped, tag = 'scoped memory for tpu_custom_call.1']
    #allocation5 [shape = 'u8[8192]{0}', space=vmem, size = 0x2000, scoped, tag = 'input window, operand 1']
    #allocation6 [shape = 's32[2]{0}', space=sflag, size = 0x8, scoped, tag = 'scoped memory for tpu_custom_call.1']
    #allocation7 [shape = 'u8[8192]{0}', space=vmem, size = 0x2000, scoped, tag = 'input window, operand 2']
    #allocation8 [shape = 'u8[24576]{0}', space=vmem, size = 0x6000, scoped, tag = 'input window, operand 3, single buffered']
    #allocation9 [shape = 's32[1]{0}', space=sflag, size = 0x4, scoped, tag = 'scoped memory for tpu_custom_call.1']
    #allocation10 [shape = 'u8[16384]{0}', space=vmem, size = 0x4000, scoped, tag = 'output window, operand 0']
    #allocation11 [shape = 'u8[16384]{0}', space=vmem, size = 0x4000, scoped, tag = 'output window, operand 1']
    #allocation12 [shape = 's32[2]{0}', space=sflag, size = 0x8, scoped, tag = 'scoped memory for tpu_custom_call.1']
    #allocation13 [shape = 'u8[16384]{0}', space=vmem, size = 0x4000, scoped, tag = 'output window, operand 2']
    %13 = vsyncpa [#allocation3], 0
    %s14 = scalar_lea.sflag [#allocation3], 1
    %15 = vsyncpa %s14, 0
    %16 = vsyncpa [#allocation6], 0
    %s17 = scalar_lea.sflag [#allocation6], 1
    %18 = vsyncpa %s17, 0
    %19 = vsyncpa [#allocation9], 0
    %20 = vsyncpa [#allocation4], 0
    %s21 = scalar_lea.sflag [#allocation4], 1
    %22 = vsyncpa %s21, 0
    %23 = vsyncpa [#allocation12], 0
    %s24 = scalar_lea.sflag [#allocation12], 1
    %25 = vsyncpa %s24, 0
    loop: start=0, step=1, limit=4
    $region2: #{tpu_custom_call.1} parent=1 // loop_pre_header
      _
    $region3: #{tpu_custom_call.1} parent=1 // loop_header
      %s27 = sphi 0, %s31
      %p28 = scmp.ge.s32.totalorder %s27, 4
      %s34 = sphi 0, %s46
      %s35 = sphi 0, %s42
      %s36 = sphi 0, %s34
      %s37 = sphi 0, %s35
      %s38 = sphi 0, %s36
      %s39 = sphi 0, %s37
      %s51 = sphi 0, %s53
      %s54 = sphi 0, %s51
      %s55 = sphi 0, %s54
      %s71 = sphi 0, %s55
      %s79 = sphi 0, %s81
      %s82 = sphi 0, %s79
      %s83 = sphi 0, %s82
      %s99 = sphi 0, %s83
      %s107 = sphi 0, %s109
      %s110 = sphi 0, %s107
      %s111 = sphi 0, %s110
      %s127 = sphi 0, %s111
      %s131 = sphi 0, %s131
      %s133 = sphi 0, %s131
      %s134 = sphi 0, %s133
      %s148 = sphi 0, %s134
      %s152 = sphi 0, %s152
      %s154 = sphi 0, %s152
      %s155 = sphi 0, %s154
      %s169 = sphi 0, %s155
      %s177 = sphi 0, %s179
      %s180 = sphi 0, %s177
      %s181 = sphi 0, %s180
      %s197 = sphi 0, %s181
      %s205 = sphi 0, %s207
      %s208 = sphi 0, %s205
      %s209 = sphi 0, %s208
      %s225 = sphi 0, %s209
      %s233 = sphi 0, %s235
      %s236 = sphi 0, %s233
      %s237 = sphi 0, %s236
      %s253 = sphi 0, %s237
    $region4: #{tpu_custom_call.1} parent=1 // loop_header_branch
      %30 = sbr.rel (%p28) target = $region8
    $region5: #{tpu_custom_call.1} parent=1 // loop_body
      %s32 = ssub.s32 %s27, 1
      %s33 = ssub.s32 %s27, 2
      %s40 = sadd.s32 1, %s35
      %p41 = scmp.ge.s32.totalorder %s40, 1
      %s42 = scalar_select %p41, 0, %s40
      %s43 = sadd.s32 1, %s34
      %s44 = scalar_select %p41, %s43, %s34
      %p45 = scmp.ge.s32.totalorder %s44, 2
      %s46 = scalar_select %p45, 0, %s44
      %s47 = ssub.s32 %s34, %s46
      %s48 = ssub.s32 %s35, %s42
      %s49 = sor.u32 %s47, %s48
      %p50 = scmp.eq.s32.totalorder %s49, 0
      %s52 = sadd.s32 %s51, 1
      %s53 = scalar_select %p50, %s51, %s52
      %p56 = pneg %p50
      %p57 = scmp.eq.s32.totalorder %s27, 1
      %p58 = por %p56, %p57
      %p59 = scmp.ne.s32.totalorder %s51, %s54
      %p60 = scmp.eq.s32.totalorder %s27, 0
      %p61 = por %p59, %p60
      %p62 = scmp.ne.s32.totalorder %s51, %s54
      %p63 = scmp.eq.s32.totalorder %s32, 1
      %p64 = por %p62, %p63
      %p65 = scmp.ne.s32.totalorder %s54, %s55
      %p66 = scmp.eq.s32.totalorder %s32, 0
      %p67 = por %p65, %p66
      %p68 = scmp.ne.s32.totalorder %s54, %s55
      %p69 = scmp.eq.s32.totalorder %s33, 1
      %p70 = por %p68, %p69
      %p72 = scmp.ne.s32.totalorder %s55, %s71
      %p73 = scmp.eq.s32.totalorder %s33, 0
      %p74 = por %p72, %p73
      %s75 = ssub.s32 %s34, %s46
      %s76 = ssub.s32 %s35, %s42
      %s77 = sor.u32 %s75, %s76
      %p78 = scmp.eq.s32.totalorder %s77, 0
      %s80 = sadd.s32 %s79, 1
      %s81 = scalar_select %p78, %s79, %s80
      %p84 = pneg %p78
      %p85 = scmp.eq.s32.totalorder %s27, 1
      %p86 = por %p84, %p85
      %p87 = scmp.ne.s32.totalorder %s79, %s82
      %p88 = scmp.eq.s32.totalorder %s27, 0
      %p89 = por %p87, %p88
      %p90 = scmp.ne.s32.totalorder %s79, %s82
      %p91 = scmp.eq.s32.totalorder %s32, 1
      %p92 = por %p90, %p91
      %p93 = scmp.ne.s32.totalorder %s82, %s83
      %p94 = scmp.eq.s32.totalorder %s32, 0
      %p95 = por %p93, %p94
      %p96 = scmp.ne.s32.totalorder %s82, %s83
      %p97 = scmp.eq.s32.totalorder %s33, 1
      %p98 = por %p96, %p97
      %p100 = scmp.ne.s32.totalorder %s83, %s99
      %p101 = scmp.eq.s32.totalorder %s33, 0
      %p102 = por %p100, %p101
      %s103 = ssub.s32 %s34, %s46
      %s104 = ssub.s32 %s35, %s42
      %s105 = sor.u32 %s103, %s104
      %p106 = scmp.eq.s32.totalorder %s105, 0
      %s108 = sadd.s32 %s107, 1
      %s109 = scalar_select %p106, %s107, %s108
      %p112 = pneg %p106
      %p113 = scmp.eq.s32.totalorder %s27, 1
      %p114 = por %p112, %p113
      %p115 = scmp.ne.s32.totalorder %s107, %s110
      %p116 = scmp.eq.s32.totalorder %s27, 0
      %p117 = por %p115, %p116
      %p118 = scmp.ne.s32.totalorder %s107, %s110
      %p119 = scmp.eq.s32.totalorder %s32, 1
      %p120 = por %p118, %p119
      %p121 = scmp.ne.s32.totalorder %s110, %s111
      %p122 = scmp.eq.s32.totalorder %s32, 0
      %p123 = por %p121, %p122
      %p124 = scmp.ne.s32.totalorder %s110, %s111
      %p125 = scmp.eq.s32.totalorder %s33, 1
      %p126 = por %p124, %p125
      %p128 = scmp.ne.s32.totalorder %s111, %s127
      %p129 = scmp.eq.s32.totalorder %s33, 0
      %p130 = por %p128, %p129
      %s132 = sadd.s32 %s131, 1
      %p135 = scmp.eq.s32.totalorder %s27, 1
      %p136 = scmp.ne.s32.totalorder %s131, %s133
      %p137 = scmp.eq.s32.totalorder %s27, 0
      %p138 = por %p136, %p137
      %p139 = scmp.ne.s32.totalorder %s131, %s133
      %p140 = scmp.eq.s32.totalorder %s32, 1
      %p141 = por %p139, %p140
      %p142 = scmp.ne.s32.totalorder %s133, %s134
      %p143 = scmp.eq.s32.totalorder %s32, 0
      %p144 = por %p142, %p143
      %p145 = scmp.ne.s32.totalorder %s133, %s134
      %p146 = scmp.eq.s32.totalorder %s33, 1
      %p147 = por %p145, %p146
      %p149 = scmp.ne.s32.totalorder %s134, %s148
      %p150 = scmp.eq.s32.totalorder %s33, 0
      %p151 = por %p149, %p150
      %s153 = sadd.s32 %s152, 1
      %p156 = scmp.eq.s32.totalorder %s27, 1
      %p157 = scmp.ne.s32.totalorder %s152, %s154
      %p158 = scmp.eq.s32.totalorder %s27, 0
      %p159 = por %p157, %p158
      %p160 = scmp.ne.s32.totalorder %s152, %s154
      %p161 = scmp.eq.s32.totalorder %s32, 1
      %p162 = por %p160, %p161
      %p163 = scmp.ne.s32.totalorder %s154, %s155
      %p164 = scmp.eq.s32.totalorder %s32, 0
      %p165 = por %p163, %p164
      %p166 = scmp.ne.s32.totalorder %s154, %s155
      %p167 = scmp.eq.s32.totalorder %s33, 1
      %p168 = por %p166, %p167
      %p170 = scmp.ne.s32.totalorder %s155, %s169
      %p171 = scmp.eq.s32.totalorder %s33, 0
      %p172 = por %p170, %p171
      %s173 = ssub.s32 %s34, %s46
      %s174 = ssub.s32 %s35, %s42
      %s175 = sor.u32 %s173, %s174
      %p176 = scmp.eq.s32.totalorder %s175, 0
      %s178 = sadd.s32 %s177, 1
      %s179 = scalar_select %p176, %s177, %s178
      %p182 = pneg %p176
      %p183 = scmp.eq.s32.totalorder %s27, 1
      %p184 = por %p182, %p183
      %p185 = scmp.ne.s32.totalorder %s177, %s180
      %p186 = scmp.eq.s32.totalorder %s27, 0
      %p187 = por %p185, %p186
      %p188 = scmp.ne.s32.totalorder %s177, %s180
      %p189 = scmp.eq.s32.totalorder %s32, 1
      %p190 = por %p188, %p189
      %p191 = scmp.ne.s32.totalorder %s180, %s181
      %p192 = scmp.eq.s32.totalorder %s32, 0
      %p193 = por %p191, %p192
      %p194 = scmp.ne.s32.totalorder %s180, %s181
      %p195 = scmp.eq.s32.totalorder %s33, 1
      %p196 = por %p194, %p195
      %p198 = scmp.ne.s32.totalorder %s181, %s197
      %p199 = scmp.eq.s32.totalorder %s33, 0
      %p200 = por %p198, %p199
      %s201 = ssub.s32 %s34, %s46
      %s202 = ssub.s32 %s35, %s42
      %s203 = sor.u32 %s201, %s202
      %p204 = scmp.eq.s32.totalorder %s203, 0
      %s206 = sadd.s32 %s205, 1
      %s207 = scalar_select %p204, %s205, %s206
      %p210 = pneg %p204
      %p211 = scmp.eq.s32.totalorder %s27, 1
      %p212 = por %p210, %p211
      %p213 = scmp.ne.s32.totalorder %s205, %s208
      %p214 = scmp.eq.s32.totalorder %s27, 0
      %p215 = por %p213, %p214
      %p216 = scmp.ne.s32.totalorder %s205, %s208
      %p217 = scmp.eq.s32.totalorder %s32, 1
      %p218 = por %p216, %p217
      %p219 = scmp.ne.s32.totalorder %s208, %s209
      %p220 = scmp.eq.s32.totalorder %s32, 0
      %p221 = por %p219, %p220
      %p222 = scmp.ne.s32.totalorder %s208, %s209
      %p223 = scmp.eq.s32.totalorder %s33, 1
      %p224 = por %p222, %p223
      %p226 = scmp.ne.s32.totalorder %s209, %s225
      %p227 = scmp.eq.s32.totalorder %s33, 0
      %p228 = por %p226, %p227
      %s229 = ssub.s32 %s34, %s46
      %s230 = ssub.s32 %s35, %s42
      %s231 = sor.u32 %s229, %s230
      %p232 = scmp.eq.s32.totalorder %s231, 0
      %s234 = sadd.s32 %s233, 1
      %s235 = scalar_select %p232, %s233, %s234
      %p238 = pneg %p232
      %p239 = scmp.eq.s32.totalorder %s27, 1
      %p240 = por %p238, %p239
      %p241 = scmp.ne.s32.totalorder %s233, %s236
      %p242 = scmp.eq.s32.totalorder %s27, 0
      %p243 = por %p241, %p242
      %p244 = scmp.ne.s32.totalorder %s233, %s236
      %p245 = scmp.eq.s32.totalorder %s32, 1
      %p246 = por %p244, %p245
      %p247 = scmp.ne.s32.totalorder %s236, %s237
      %p248 = scmp.eq.s32.totalorder %s32, 0
      %p249 = por %p247, %p248
      %p250 = scmp.ne.s32.totalorder %s236, %s237
      %p251 = scmp.eq.s32.totalorder %s33, 1
      %p252 = por %p250, %p251
      %p254 = scmp.ne.s32.totalorder %s237, %s253
      %p255 = scmp.eq.s32.totalorder %s33, 0
      %p256 = por %p254, %p255
      %p257 = scmp.le.s32.totalorder 1, %s27
      %p258 = scmp.lt.s32.totalorder %s27, 3
      %p259 = pnand %p257, %p258
      %p260 = pneg %p259
      // Predicated region
      $region9: #{tpu_custom_call.1} parent=5 // pred_check
        _
      $region10: #{tpu_custom_call.1} parent=5 // pred_check_branch
        %262 = sbr.rel (%p259) target = $region12
      $region11: #{tpu_custom_call.1} parent=5 // pred_region
        %s263 = ssub.s32 %s27, 1
        // Predicated region
        $region13: #{tpu_custom_call.1} parent=11 // pred_check
          %p264 = pneg %p144
        $region14: #{tpu_custom_call.1} parent=11 // pred_check_branch
          %266 = sbr.rel (%p264) target = $region16
        $region15: #{tpu_custom_call.1} parent=11 // pred_region
          %s268 = ssub.s32 768, 768
          %269 = vsyncadd [#allocation9], %s268
          %s270 = sshll.u32 [#allocation8], 4
          %s271 = int_to_ptr.vmem [resolvable:$true] %s270
          %276 = dma.hbm_to_vmem [thread:$0]  %s3, 768, %s271, [#allocation9], 64, 64, 4
        $region16: #{tpu_custom_call.1} parent=11 // pred_fallthru
          _
        // Predicated region
        $region17: #{tpu_custom_call.1} parent=11 // pred_check
          %p277 = pneg %p165
        $region18: #{tpu_custom_call.1} parent=11 // pred_check_branch
          %279 = sbr.rel (%p277) target = $region20
        $region19: #{tpu_custom_call.1} parent=11 // pred_region
          _
        $region20: #{tpu_custom_call.1} parent=11 // pred_fallthru
          _
      $region12: #{tpu_custom_call.1} parent=5 // pred_fallthru
        _
      %p280 = scmp.lt.s32.totalorder %s27, 2
      // Predicated region
      $region21: #{tpu_custom_call.1} parent=5 // pred_check
        %p281 = pneg %p280
      $region22: #{tpu_custom_call.1} parent=5 // pred_check_branch
        %283 = sbr.rel (%p281) target = $region24
      $region23: #{tpu_custom_call.1} parent=5 // pred_region
        // Predicated region
        $region25: #{tpu_custom_call.1} parent=23 // pred_check
          %p284 = pneg %p61
        $region26: #{tpu_custom_call.1} parent=23 // pred_check_branch
          %286 = sbr.rel (%p284) target = $region28
        $region27: #{tpu_custom_call.1} parent=23 // pred_region
          %s287 = sand.u32 %s51, 1
          %s288 = scalar_lea.sflag [#allocation3], %s287
          %s289 = sand.u32 %s51, 1
          %s290 = smul.addr %s289, 8
          %s291 = scalar_lea.vmem [#allocation2], %s290
          %s293 = ssub.s32 128, 128
          %294 = vsyncadd %s288, %s293
          %s295 = sadd.s32 %s35, %s34
          %s296 = smul.addr %s295, 128
          %s297 = scalar_lea.hbm %s0, %s296
          %s299 = sshll.u32 %s291, 4
          %s300 = int_to_ptr.vmem [resolvable:$true] %s299
          %302 = dma.hbm_to_vmem [thread:$0]  %s297, 128, %s300, %s288
        $region28: #{tpu_custom_call.1} parent=23 // pred_fallthru
          _
        // Predicated region
        $region29: #{tpu_custom_call.1} parent=23 // pred_check
          %p303 = pneg %p89
        $region30: #{tpu_custom_call.1} parent=23 // pred_check_branch
          %305 = sbr.rel (%p303) target = $region32
        $region31: #{tpu_custom_call.1} parent=23 // pred_region
          %s306 = sand.u32 %s27, 1
          %s307 = scalar_lea.sflag [#allocation6], %s306
          %s308 = sand.u32 %s79, 1
          %s309 = smul.addr %s308, 8
          %s310 = scalar_lea.vmem [#allocation5], %s309
          %s312 = ssub.s32 128, 128
          %313 = vsyncadd %s307, %s312
          %s314 = sadd.s32 %s35, %s34
          %s315 = smul.addr %s314, 128
          %s316 = scalar_lea.hbm %s1, %s315
          %s318 = sshll.u32 %s310, 4
          %s319 = int_to_ptr.vmem [resolvable:$true] %s318
          %321 = dma.hbm_to_vmem [thread:$0]  %s316, 128, %s319, %s307
        $region32: #{tpu_custom_call.1} parent=23 // pred_fallthru
          _
        // Predicated region
        $region33: #{tpu_custom_call.1} parent=23 // pred_check
          %p322 = pneg %p117
        $region34: #{tpu_custom_call.1} parent=23 // pred_check_branch
          %324 = sbr.rel (%p322) target = $region36
        $region35: #{tpu_custom_call.1} parent=23 // pred_region
          %s325 = sand.u32 %s27, 1
          %s326 = scalar_lea.sflag [#allocation6], %s325
          %s327 = sand.u32 %s107, 1
          %s328 = smul.addr %s327, 8
          %s329 = scalar_lea.vmem [#allocation7], %s328
          %s331 = ssub.s32 128, 128
          %332 = vsyncadd %s326, %s331
          %s333 = sadd.s32 %s35, %s34
          %s334 = smul.addr %s333, 128
          %s335 = scalar_lea.hbm %s2, %s334
          %s337 = sshll.u32 %s329, 4
          %s338 = int_to_ptr.vmem [resolvable:$true] %s337
          %340 = dma.hbm_to_vmem [thread:$0]  %s335, 128, %s338, %s326
        $region36: #{tpu_custom_call.1} parent=23 // pred_fallthru
          _
      $region24: #{tpu_custom_call.1} parent=5 // pred_fallthru
        _
      %p341 = scmp.le.s32.totalorder 1, %s27
      %p342 = scmp.lt.s32.totalorder %s27, 3
      %p343 = pnand %p341, %p342
      %p344 = pneg %p343
      // Predicated region
      $region37: #{tpu_custom_call.1} parent=5 // pred_check
        _
      $region38: #{tpu_custom_call.1} parent=5 // pred_check_branch
        %346 = sbr.rel (%p343) target = $region40
      $region39: #{tpu_custom_call.1} parent=5 // pred_region
        %s347 = ssub.s32 %s27, 1
        %s348 = sand.u32 %s54, 1
        %s349 = scalar_lea.sflag [#allocation3], %s348
        %s350 = sand.u32 %s54, 1
        %s351 = smul.addr %s350, 8
        %s352 = scalar_lea.vmem [#allocation2], %s351
        // Predicated region
        $region41: #{tpu_custom_call.1} parent=39 // pred_check
          %p353 = pneg %p67
        $region42: #{tpu_custom_call.1} parent=39 // pred_check_branch
          %355 = sbr.rel (%p353) target = $region44
        $region43: #{tpu_custom_call.1} parent=39 // pred_region
          %356 = dma.done %s349, 128
        $region44: #{tpu_custom_call.1} parent=39 // pred_fallthru
          _
        %s357 = sand.u32 %s32, 1
        %s358 = scalar_lea.sflag [#allocation6], %s357
        %s359 = sand.u32 %s82, 1
        %s360 = smul.addr %s359, 8
        %s361 = scalar_lea.vmem [#allocation5], %s360
        // Predicated region
        $region45: #{tpu_custom_call.1} parent=39 // pred_check
          %p362 = pneg %p95
        $region46: #{tpu_custom_call.1} parent=39 // pred_check_branch
          %364 = sbr.rel (%p362) target = $region48
        $region47: #{tpu_custom_call.1} parent=39 // pred_region
          %365 = dma.done %s358, 128
        $region48: #{tpu_custom_call.1} parent=39 // pred_fallthru
          _
        %s366 = sand.u32 %s32, 1
        %s367 = scalar_lea.sflag [#allocation6], %s366
        %s368 = sand.u32 %s110, 1
        %s369 = smul.addr %s368, 8
        %s370 = scalar_lea.vmem [#allocation7], %s369
        // Predicated region
        $region49: #{tpu_custom_call.1} parent=39 // pred_check
          %p371 = pneg %p123
        $region50: #{tpu_custom_call.1} parent=39 // pred_check_branch
          %373 = sbr.rel (%p371) target = $region52
        $region51: #{tpu_custom_call.1} parent=39 // pred_region
          %374 = dma.done %s367, 128
        $region52: #{tpu_custom_call.1} parent=39 // pred_fallthru
          _
        // Predicated region
        $region53: #{tpu_custom_call.1} parent=39 // pred_check
          %p375 = pneg %p144
        $region54: #{tpu_custom_call.1} parent=39 // pred_check_branch
          %377 = sbr.rel (%p375) target = $region56
        $region55: #{tpu_custom_call.1} parent=39 // pred_region
          %378 = dma.done [#allocation9], 768
        $region56: #{tpu_custom_call.1} parent=39 // pred_fallthru
          _
        %s379 = sand.u32 %s54, 1
        %s380 = scalar_lea.sflag [#allocation3], %s379
        %s381 = sand.u32 %s54, 1
        %s382 = smul.addr %s381, 8
        %s383 = scalar_lea.vmem [#allocation2], %s382
        %p384 = pneg %p67
        %p385 = pneg %p64
        %s386 = sand.u32 %s32, 1
        %s387 = scalar_lea.sflag [#allocation6], %s386
        %s388 = sand.u32 %s82, 1
        %s389 = smul.addr %s388, 8
        %s390 = scalar_lea.vmem [#allocation5], %s389
        %p391 = pneg %p95
        %p392 = pneg %p92
        %s393 = sand.u32 %s32, 1
        %s394 = scalar_lea.sflag [#allocation6], %s393
        %s395 = sand.u32 %s110, 1
        %s396 = smul.addr %s395, 8
        %s397 = scalar_lea.vmem [#allocation7], %s396
        %p398 = pneg %p123
        %p399 = pneg %p120
        %p400 = pneg %p144
        %p401 = pneg %p141
        %p402 = pneg %p165
        %p403 = pneg %p162
        %p404 = pneg %p193
        %p405 = pneg %p190
        %s406 = sand.u32 %s180, 1
        %s407 = scalar_lea.sflag [#allocation4], %s406
        %s408 = sand.u32 %s180, 1
        %s409 = smul.addr %s408, 16
        %s410 = scalar_lea.vmem [#allocation10], %s409
        %p411 = pneg %p221
        %p412 = pneg %p218
        %s413 = sand.u32 %s32, 1
        %s414 = scalar_lea.sflag [#allocation12], %s413
        %s415 = sand.u32 %s208, 1
        %s416 = smul.addr %s415, 16
        %s417 = scalar_lea.vmem [#allocation11], %s416
        %p418 = pneg %p249
        %p419 = pneg %p246
        %s420 = sand.u32 %s32, 1
        %s421 = scalar_lea.sflag [#allocation12], %s420
        %s422 = sand.u32 %s236, 1
        %s423 = smul.addr %s422, 16
        %s424 = scalar_lea.vmem [#allocation13], %s423
        %v426 = vld [vmem:[%s352] sm:$0xff]
        %v427 = vpack.c.bf16 %v426, %v426
        %v428 = vld [vmem:[#allocation8] sm:$0xf]
        %v429 = vld [vmem:[#allocation8 + $0x4] sm:$0xf]
        %v430 = vld [vmem:[#allocation8 + $0x8] sm:$0xf]
        %v431 = vld [vmem:[#allocation8 + $0xc] sm:$0xf]
        %v432 = vld [vmem:[%s4] sm:$0x1]
        %v434 = vlaneseq
        %v435 = vshrl.u32 %v434, 7
        %v436 = vsub.s32 0, %v435
        %v437 = vrot.slane %v432, %v436
        %v443 = vunpack.c.l.b16 %v428
        %v444 = vunpack.c.l.b16 %v429
        %v445 = vunpack.c.l.b16 %v430
        %v446 = vunpack.c.l.b16 %v431
        %v447 = vpack.c.b16 %v444, %v443
        %v448 = vpack.c.b16 %v446, %v445
        %vm451 = vcmask 261120
        %v453 = vsel %vm451, %v427, 0
        %455 = vmatprep.subr.bf16.mxu0 0
        %456 = vmatpush1.bf16.msra.mxu0 0
        %457 = vmatprep.subr.bf16.mxu0 0
        %458 = vmatpush1.bf16.msra.mxu0 0
        %459 = vmatprep.subr.bf16.mxu0 0
        %460 = vmatpush1.bf16.msra.mxu0 0
        %461 = vmatprep.subr.bf16.mxu0 0
        %462 = vmatpush1.bf16.msra.mxu0 0
        %463 = vmatprep.subr.bf16.mxu0 0
        %464 = vmatpush1.bf16.msra.mxu0 0
        %465 = vmatprep.subr.bf16.mxu0 0
        %466 = vmatpush1.bf16.msra.mxu0 0
        %467 = vmatprep.subr.bf16.mxu0 0
        %468 = vmatpush1.bf16.msra.mxu0 %v448
        %469 = vmatprep.subr.bf16.mxu0 0
        %470 = vmatpush1.bf16.msra.mxu0 %v447
        %471 = vmatprep.subr.bf16.mxu0 0
        %472 = vmatpush2.bf16.msra.mxu0 0
        %473 = vmatprep.subr.bf16.mxu0 0
        %474 = vmatpush2.bf16.msra.mxu0 0
        %475 = vmatprep.subr.bf16.mxu0 0
        %476 = vmatpush2.bf16.msra.mxu0 0
        %477 = vmatprep.subr.bf16.mxu0 0
        %478 = vmatpush2.bf16.msra.mxu0 0
        %479 = vmatprep.subr.bf16.mxu0 0
        %480 = vmatpush2.bf16.msra.mxu0 0
        %481 = vmatprep.subr.bf16.mxu0 0
        %482 = vmatpush2.bf16.msra.mxu0 0
        %483 = vmatprep.subr.bf16.mxu0 0
        %484 = vmatpush2.bf16.msra.mxu0 0
        %485 = vmatprep.subr.bf16.mxu0 0
        %486 = vmatpush2.bf16.msra.mxu0 0
        %487 = vmatprep.mubr.bf16.mxu0 0
        %488 = vmatmul.mubr.bf16.gmra.mxu0 %v453
        %v489 = vpop.f32.mrf.mxu0
        %v490 = vadd.f32 %v437, %v489
        %v491 = vpop.f32.mrf.mxu0
        %v492 = vpop.f32.mrf.mxu0
        %v493 = vpop.f32.mrf.mxu0
        %494 = vdwg.mxu0
        %v495 = vpack.c.bf16 %v490, %v490
        %vm496 = vcmask 60416
        %497 = vst.msk [vmem:[%s410] sm:$0xf] %vm496, %v495
        %v499 = vunpack.c.l.b16 %v495
        %v500 = vpack.c.b16 %v499, %v499
        %501 = vrot.lane.b32.xlu0 %v500, 120
        %v502 = vpop.permute.xlu0 %501
        %s504 = scalar_lea.vmem %s410, 4 [#allocation10]
        %505 = vst.msk [vmem:[%s504] sm:$0xf] %vm496, %v502
        %506 = vrot.lane.b32.xlu0 %v500, 112
        %v507 = vpop.permute.xlu0 %506
        %s509 = scalar_lea.vmem %s410, 8 [#allocation10]
        %510 = vst.msk [vmem:[%s509] sm:$0xf] %vm496, %v507
        %511 = vrot.lane.b32.xlu0 %v500, 104
        %v512 = vpop.permute.xlu0 %511
        %s514 = scalar_lea.vmem %s410, 12 [#allocation10]
        %515 = vst.msk [vmem:[%s514] sm:$0xf] %vm496, %v512
        %v516 = vld [vmem:[%s361] sm:$0xff]
        %v517 = vpack.c.bf16 %v516, %v516
        %s518 = scalar_lea.vmem [#allocation8], 16
        %v519 = vld [vmem:[%s518] sm:$0xf]
        %v520 = vld [vmem:[%s518 + $0x4] sm:$0xf]
        %v521 = vld [vmem:[%s518 + $0x8] sm:$0xf]
        %v522 = vld [vmem:[%s518 + $0xc] sm:$0xf]
        %s523 = scalar_lea.vmem %s4, 1
        %v524 = vld [vmem:[%s523] sm:$0x1]
        %v526 = vlaneseq
        %v527 = vshrl.u32 %v526, 7
        %v528 = vsub.s32 0, %v527
        %v529 = vrot.slane %v524, %v528
        %v535 = vunpack.c.l.b16 %v519
        %v536 = vunpack.c.l.b16 %v520
        %v537 = vunpack.c.l.b16 %v521
        %v538 = vunpack.c.l.b16 %v522
        %v539 = vpack.c.b16 %v536, %v535
        %v540 = vpack.c.b16 %v538, %v537
        %v544 = vsel %vm451, %v517, 0
        %546 = vmatprep.subr.bf16.mxu0 0
        %547 = vmatpush1.bf16.msra.mxu0 0
        %548 = vmatprep.subr.bf16.mxu0 0
        %549 = vmatpush1.bf16.msra.mxu0 0
        %550 = vmatprep.subr.bf16.mxu0 0
        %551 = vmatpush1.bf16.msra.mxu0 0
        %552 = vmatprep.subr.bf16.mxu0 0
        %553 = vmatpush1.bf16.msra.mxu0 0
        %554 = vmatprep.subr.bf16.mxu0 0
        %555 = vmatpush1.bf16.msra.mxu0 0
        %556 = vmatprep.subr.bf16.mxu0 0
        %557 = vmatpush1.bf16.msra.mxu0 0
        %558 = vmatprep.subr.bf16.mxu0 0
        %559 = vmatpush1.bf16.msra.mxu0 %v540
        %560 = vmatprep.subr.bf16.mxu0 0
        %561 = vmatpush1.bf16.msra.mxu0 %v539
        %562 = vmatprep.subr.bf16.mxu0 0
        %563 = vmatpush2.bf16.msra.mxu0 0
        %564 = vmatprep.subr.bf16.mxu0 0
        %565 = vmatpush2.bf16.msra.mxu0 0
        %566 = vmatprep.subr.bf16.mxu0 0
        %567 = vmatpush2.bf16.msra.mxu0 0
        %568 = vmatprep.subr.bf16.mxu0 0
        %569 = vmatpush2.bf16.msra.mxu0 0
        %570 = vmatprep.subr.bf16.mxu0 0
        %571 = vmatpush2.bf16.msra.mxu0 0
        %572 = vmatprep.subr.bf16.mxu0 0
        %573 = vmatpush2.bf16.msra.mxu0 0
        %574 = vmatprep.subr.bf16.mxu0 0
        %575 = vmatpush2.bf16.msra.mxu0 0
        %576 = vmatprep.subr.bf16.mxu0 0
        %577 = vmatpush2.bf16.msra.mxu0 0
        %578 = vmatprep.mubr.bf16.mxu0 0
        %579 = vmatmul.mubr.bf16.gmra.mxu0 %v544
        %v580 = vpop.f32.mrf.mxu0
        %v581 = vadd.f32 %v529, %v580
        %v582 = vpop.f32.mrf.mxu0
        %v583 = vpop.f32.mrf.mxu0
        %v584 = vpop.f32.mrf.mxu0
        %585 = vdwg.mxu0
        %v586 = vpack.c.bf16 %v581, %v581
        %587 = vst.msk [vmem:[%s417] sm:$0xf] %vm496, %v586
        %v589 = vunpack.c.l.b16 %v586
        %v590 = vpack.c.b16 %v589, %v589
        %591 = vrot.lane.b32.xlu0 %v590, 120
        %v592 = vpop.permute.xlu0 %591
        %s594 = scalar_lea.vmem %s417, 4 [#allocation11]
        %595 = vst.msk [vmem:[%s594] sm:$0xf] %vm496, %v592
        %596 = vrot.lane.b32.xlu0 %v590, 112
        %v597 = vpop.permute.xlu0 %596
        %s599 = scalar_lea.vmem %s417, 8 [#allocation11]
        %600 = vst.msk [vmem:[%s599] sm:$0xf] %vm496, %v597
        %601 = vrot.lane.b32.xlu0 %v590, 104
        %v602 = vpop.permute.xlu0 %601
        %s604 = scalar_lea.vmem %s417, 12 [#allocation11]
        %605 = vst.msk [vmem:[%s604] sm:$0xf] %vm496, %v602
        %v606 = vld [vmem:[%s370] sm:$0xff]
        %v607 = vpack.c.bf16 %v606, %v606
        %s608 = scalar_lea.vmem [#allocation8], 32
        %v609 = vld [vmem:[%s608] sm:$0xf]
        %v610 = vld [vmem:[%s608 + $0x4] sm:$0xf]
        %v611 = vld [vmem:[%s608 + $0x8] sm:$0xf]
        %v612 = vld [vmem:[%s608 + $0xc] sm:$0xf]
        %s613 = scalar_lea.vmem %s4, 2
        %v614 = vld [vmem:[%s613] sm:$0x1]
        %v616 = vlaneseq
        %v617 = vshrl.u32 %v616, 7
        %v618 = vsub.s32 0, %v617
        %v619 = vrot.slane %v614, %v618
        %v625 = vunpack.c.l.b16 %v609
        %v626 = vunpack.c.l.b16 %v610
        %v627 = vunpack.c.l.b16 %v611
        %v628 = vunpack.c.l.b16 %v612
        %v629 = vpack.c.b16 %v626, %v625
        %v630 = vpack.c.b16 %v628, %v627
        %v634 = vsel %vm451, %v607, 0
        %636 = vmatprep.subr.bf16.mxu0 0
        %637 = vmatpush1.bf16.msra.mxu0 0
        %638 = vmatprep.subr.bf16.mxu0 0
        %639 = vmatpush1.bf16.msra.mxu0 0
        %640 = vmatprep.subr.bf16.mxu0 0
        %641 = vmatpush1.bf16.msra.mxu0 0
        %642 = vmatprep.subr.bf16.mxu0 0
        %643 = vmatpush1.bf16.msra.mxu0 0
        %644 = vmatprep.subr.bf16.mxu0 0
        %645 = vmatpush1.bf16.msra.mxu0 0
        %646 = vmatprep.subr.bf16.mxu0 0
        %647 = vmatpush1.bf16.msra.mxu0 0
        %648 = vmatprep.subr.bf16.mxu0 0
        %649 = vmatpush1.bf16.msra.mxu0 %v630
        %650 = vmatprep.subr.bf16.mxu0 0
        %651 = vmatpush1.bf16.msra.mxu0 %v629
        %652 = vmatprep.subr.bf16.mxu0 0
        %653 = vmatpush2.bf16.msra.mxu0 0
        %654 = vmatprep.subr.bf16.mxu0 0
        %655 = vmatpush2.bf16.msra.mxu0 0
        %656 = vmatprep.subr.bf16.mxu0 0
        %657 = vmatpush2.bf16.msra.mxu0 0
        %658 = vmatprep.subr.bf16.mxu0 0
        %659 = vmatpush2.bf16.msra.mxu0 0
        %660 = vmatprep.subr.bf16.mxu0 0
        %661 = vmatpush2.bf16.msra.mxu0 0
        %662 = vmatprep.subr.bf16.mxu0 0
        %663 = vmatpush2.bf16.msra.mxu0 0
        %664 = vmatprep.subr.bf16.mxu0 0
        %665 = vmatpush2.bf16.msra.mxu0 0
        %666 = vmatprep.subr.bf16.mxu0 0
        %667 = vmatpush2.bf16.msra.mxu0 0
        %668 = vmatprep.mubr.bf16.mxu0 0
        %669 = vmatmul.mubr.bf16.gmra.mxu0 %v634
        %v670 = vpop.f32.mrf.mxu0
        %v671 = vadd.f32 %v619, %v670
        %v672 = vpop.f32.mrf.mxu0
        %v673 = vpop.f32.mrf.mxu0
        %v674 = vpop.f32.mrf.mxu0
        %675 = vdwg.mxu0
        %v676 = vpack.c.bf16 %v671, %v671
        %677 = vst.msk [vmem:[%s424] sm:$0xf] %vm496, %v676
        %v679 = vunpack.c.l.b16 %v676
        %v680 = vpack.c.b16 %v679, %v679
        %681 = vrot.lane.b32.xlu0 %v680, 120
        %v682 = vpop.permute.xlu0 %681
        %s684 = scalar_lea.vmem %s424, 4 [#allocation13]
        %685 = vst.msk [vmem:[%s684] sm:$0xf] %vm496, %v682
        %686 = vrot.lane.b32.xlu0 %v680, 112
        %v687 = vpop.permute.xlu0 %686
        %s689 = scalar_lea.vmem %s424, 8 [#allocation13]
        %690 = vst.msk [vmem:[%s689] sm:$0xf] %vm496, %v687
        %691 = vrot.lane.b32.xlu0 %v680, 104
        %v692 = vpop.permute.xlu0 %691
        %s694 = scalar_lea.vmem %s424, 12 [#allocation13]
        %695 = vst.msk [vmem:[%s694] sm:$0xf] %vm496, %v692
        %s696 = sand.u32 %s180, 1
        %s697 = scalar_lea.sflag [#allocation4], %s696
        %s698 = sand.u32 %s180, 1
        %s699 = smul.addr %s698, 16
        %s700 = scalar_lea.vmem [#allocation10], %s699
        %s701 = sand.u32 %s32, 1
        %s702 = scalar_lea.sflag [#allocation12], %s701
        %s703 = sand.u32 %s208, 1
        %s704 = smul.addr %s703, 16
        %s705 = scalar_lea.vmem [#allocation11], %s704
        %s706 = sand.u32 %s32, 1
        %s707 = scalar_lea.sflag [#allocation12], %s706
        %s708 = sand.u32 %s236, 1
        %s709 = smul.addr %s708, 16
        %s710 = scalar_lea.vmem [#allocation13], %s709
        // Predicated region
        $region57: #{tpu_custom_call.1} parent=39 // pred_check
          %p711 = pneg %p190
        $region58: #{tpu_custom_call.1} parent=39 // pred_check_branch
          %713 = sbr.rel (%p711) target = $region60
        $region59: #{tpu_custom_call.1} parent=39 // pred_region
          %s715 = ssub.s32 256, 256
          %716 = vsyncadd %s697, %s715
          %s717 = smul.addr %s36, 4
          %s718 = sadd.s32 %s37, %s717
          %s719 = smul.addr %s718, 64
          %s720 = scalar_lea.hbm %s5, %s719
          %s721 = sshll.u32 %s700, 4
          %s722 = int_to_ptr.vmem [resolvable:$true] %s721
          %727 = dma.vmem_to_hbm [thread:$0]  %s722, 256, %s720, %s697, 64, 64, 4
        $region60: #{tpu_custom_call.1} parent=39 // pred_fallthru
          _
        // Predicated region
        $region61: #{tpu_custom_call.1} parent=39 // pred_check
          %p728 = pneg %p218
        $region62: #{tpu_custom_call.1} parent=39 // pred_check_branch
          %730 = sbr.rel (%p728) target = $region64
        $region63: #{tpu_custom_call.1} parent=39 // pred_region
          %s732 = ssub.s32 256, 256
          %733 = vsyncadd %s702, %s732
          %s734 = smul.addr %s36, 4
          %s735 = sadd.s32 %s37, %s734
          %s736 = smul.addr %s735, 64
          %s737 = scalar_lea.hbm %s6, %s736
          %s738 = sshll.u32 %s705, 4
          %s739 = int_to_ptr.vmem [resolvable:$true] %s738
          %744 = dma.vmem_to_hbm [thread:$0]  %s739, 256, %s737, %s702, 64, 64, 4
        $region64: #{tpu_custom_call.1} parent=39 // pred_fallthru
          _
        // Predicated region
        $region65: #{tpu_custom_call.1} parent=39 // pred_check
          %p745 = pneg %p246
        $region66: #{tpu_custom_call.1} parent=39 // pred_check_branch
          %747 = sbr.rel (%p745) target = $region68
        $region67: #{tpu_custom_call.1} parent=39 // pred_region
          %s749 = ssub.s32 256, 256
          %750 = vsyncadd %s707, %s749
          %s751 = smul.addr %s36, 4
          %s752 = sadd.s32 %s37, %s751
          %s753 = smul.addr %s752, 64
          %s754 = scalar_lea.hbm %s7, %s753
          %s755 = sshll.u32 %s710, 4
          %s756 = int_to_ptr.vmem [resolvable:$true] %s755
          %761 = dma.vmem_to_hbm [thread:$0]  %s756, 256, %s754, %s707, 64, 64, 4
        $region68: #{tpu_custom_call.1} parent=39 // pred_fallthru
          _
      $region40: #{tpu_custom_call.1} parent=5 // pred_fallthru
        _
      %p762 = scmp.le.s32.totalorder 2, %s27
      // Predicated region
      $region69: #{tpu_custom_call.1} parent=5 // pred_check
        %p763 = pneg %p762
      $region70: #{tpu_custom_call.1} parent=5 // pred_check_branch
        %765 = sbr.rel (%p763) target = $region72
      $region71: #{tpu_custom_call.1} parent=5 // pred_region
        %s766 = ssub.s32 %s27, 2
        // Predicated region
        $region73: #{tpu_custom_call.1} parent=71 // pred_check
          %p767 = pneg %p196
        $region74: #{tpu_custom_call.1} parent=71 // pred_check_branch
          %769 = sbr.rel (%p767) target = $region76
        $region75: #{tpu_custom_call.1} parent=71 // pred_region
          %s770 = sand.u32 %s181, 1
          %s771 = scalar_lea.sflag [#allocation4], %s770
          %s772 = sand.u32 %s181, 1
          %s773 = smul.addr %s772, 16
          %s774 = scalar_lea.vmem [#allocation10], %s773
          %775 = dma.done %s771, 256
        $region76: #{tpu_custom_call.1} parent=71 // pred_fallthru
          _
        // Predicated region
        $region77: #{tpu_custom_call.1} parent=71 // pred_check
          %p776 = pneg %p224
        $region78: #{tpu_custom_call.1} parent=71 // pred_check_branch
          %778 = sbr.rel (%p776) target = $region80
        $region79: #{tpu_custom_call.1} parent=71 // pred_region
          %s779 = sand.u32 %s33, 1
          %s780 = scalar_lea.sflag [#allocation12], %s779
          %s781 = sand.u32 %s209, 1
          %s782 = smul.addr %s781, 16
          %s783 = scalar_lea.vmem [#allocation11], %s782
          %784 = dma.done %s780, 256
        $region80: #{tpu_custom_call.1} parent=71 // pred_fallthru
          _
        // Predicated region
        $region81: #{tpu_custom_call.1} parent=71 // pred_check
          %p785 = pneg %p252
        $region82: #{tpu_custom_call.1} parent=71 // pred_check_branch
          %787 = sbr.rel (%p785) target = $region84
        $region83: #{tpu_custom_call.1} parent=71 // pred_region
          %s788 = sand.u32 %s33, 1
          %s789 = scalar_lea.sflag [#allocation12], %s788
          %s790 = sand.u32 %s237, 1
          %s791 = smul.addr %s790, 16
          %s792 = scalar_lea.vmem [#allocation13], %s791
          %793 = dma.done %s789, 256
        $region84: #{tpu_custom_call.1} parent=71 // pred_fallthru
          _
      $region72: #{tpu_custom_call.1} parent=5 // pred_fallthru
        _
    $region6: #{tpu_custom_call.1} parent=1 // loop_footer
      %s31 = sadd.s32 1, %s27
    $region7: #{tpu_custom_call.1} parent=1 // loop_footer_branch
      %26 = sbr.rel target = $region3
    $region8: #{tpu_custom_call.1} parent=1 // loop_exit
      _
    %794 = vsyncpa [#allocation3], 1
    %s795 = scalar_lea.sflag [#allocation3], 1
    %796 = vsyncpa %s795, 1
    %797 = vsyncpa [#allocation6], 1
    %s798 = scalar_lea.sflag [#allocation6], 1
    %799 = vsyncpa %s798, 1
    %800 = vsyncpa [#allocation9], 1
    %801 = vsyncpa [#allocation4], 1
    %s802 = scalar_lea.sflag [#allocation4], 1
    %803 = vsyncpa %s802, 1
    %804 = vsyncpa [#allocation12], 1
    %s805 = scalar_lea.sflag [#allocation12], 1
    %806 = vsyncpa %s805, 1

</llo_original>
